<compile_context>
chip_gen: v7x
topology: tpu7x:2x2x1
jax: 0.10.0
libtpu: 0.0.40
codegen_flags: <defaults>
</compile_context>

<pallas_src>
import functools
import math

import jax
import jax.numpy as jnp
from jax import lax
from jax.experimental import pallas as pl
from jax.experimental.pallas import tpu as pltpu


def _topk_sinkhorn_kernel(scores_ref, gamma0_ref, gamma1_ref, *,
                          n, k, epsilon, max_iter):
    s = scores_ref[...]                                      # (TB, N) f32

    # Cost columns for anchors {0, 1}; the per-row max normalization and the
    # division by eps are folded into one scale:  a_j = -C_j / eps.
    c0 = s * s                                               # (s - 0)^2
    sm1 = s - 1.0
    c1 = sm1 * sm1                                           # (s - 1)^2
    cmax = jnp.maximum(jnp.max(c0, axis=-1, keepdims=True),
                       jnp.max(c1, axis=-1, keepdims=True))  # (TB, 1) per-row
    neg_scale = -1.0 / (cmax * jnp.float32(epsilon))         # exact divide
    a0 = c0 * neg_scale                                      # (TB, N)
    a1 = c1 * neg_scale

    log_mu = jnp.float32(-math.log(n))
    log_nu0 = jnp.float32(math.log(k / n))
    log_nu1 = jnp.float32(math.log((n - k) / n))

    def f_update(g0, g1):
        # f/eps = -logsumexp_j(a_j + g_j/eps) + log(mu), closed 2-column form.
        z0 = a0 + g0
        z1 = a1 + g1
        m = jnp.maximum(z0, z1)
        gap = jnp.abs(z0 - z1)
        return -(m + jnp.log(1.0 + jnp.exp(-gap))) + log_mu  # (TB, N)

    def g_update(f):
        # g_j/eps = -logsumexp_n(a_j + f/eps) + log(nu_j), per row.
        w0 = a0 + f
        w1 = a1 + f
        m0 = jnp.max(w0, axis=-1, keepdims=True)
        m1 = jnp.max(w1, axis=-1, keepdims=True)
        g0 = -(m0 + jnp.log(jnp.sum(jnp.exp(w0 - m0), axis=-1,
                                    keepdims=True))) + log_nu0
        g1 = -(m1 + jnp.log(jnp.sum(jnp.exp(w1 - m1), axis=-1,
                                    keepdims=True))) + log_nu1
        return g0, g1                                        # (TB, 1) each

    def sinkhorn_iter(g0, g1):
        return g_update(f_update(g0, g1))

    def body2(_, carry):                                     # 2x manual unroll
        g0, g1 = sinkhorn_iter(*carry)
        return sinkhorn_iter(g0, g1)

    tb = s.shape[0]
    g0 = jnp.zeros((tb, 1), jnp.float32)
    g1 = jnp.zeros((tb, 1), jnp.float32)

    if max_iter >= 1:
        n_inner = max_iter - 1          # last iteration peeled to keep f live
        g0, g1 = lax.fori_loop(0, n_inner // 2, body2, (g0, g1))
        if n_inner % 2:
            g0, g1 = sinkhorn_iter(g0, g1)
        f = f_update(g0, g1)            # final iteration: f then g, keep f
        g0, g1 = g_update(f)
    else:
        f = jnp.zeros_like(a0)

    # Gamma_j = exp((-C_j + f + g_j)/eps) = exp(a_j + f/eps + g_j/eps)
    gamma0_ref[...] = jnp.exp(a0 + f + g0)
    gamma1_ref[...] = jnp.exp(a1 + f + g1)


def topk_custom(scores, k, epsilon=0.01, max_iter=200, block_b=None):
    """scores: (B, N) -> Gamma: (B, N, 2) float32 (matches the PyTorch module)."""
    scores = jnp.asarray(scores, jnp.float32)
    B, N = scores.shape

    # Batch tile: fill sublanes but cap by vreg pressure (~8K f32 per plane;
    # ~5-6 (TB,N) planes live inside the 200-iteration loop).
    if block_b is None:
        tb = max(8, min(256, (8192 // max(N, 1)) // 8 * 8))
    else:
        tb = int(block_b)

    if B <= tb:
        TB, Bp, x = B, B, scores          # full-dim block: no (8,) constraint
    else:
        TB = max(8, (tb // 8) * 8)        # tiled blocks must be sublane-aligned
        Bp = ((B + TB - 1) // TB) * TB
        x = jnp.pad(scores, ((0, Bp - B), (0, 0))) if Bp != B else scores

    kernel = functools.partial(_topk_sinkhorn_kernel, n=N, k=int(k),
                               epsilon=float(epsilon), max_iter=int(max_iter))

    g0, g1 = pl.pallas_call(
        kernel,
        out_shape=(jax.ShapeDtypeStruct((Bp, N), jnp.float32),
                   jax.ShapeDtypeStruct((Bp, N), jnp.float32)),
        grid=(Bp // TB,),
        in_specs=[pl.BlockSpec((TB, N), lambda b: (b, 0))],
        out_specs=(pl.BlockSpec((TB, N), lambda b: (b, 0)),
                   pl.BlockSpec((TB, N), lambda b: (b, 0))),
        compiler_params=pltpu.CompilerParams(
            dimension_semantics=("parallel",)),   # shards batch across TCs (v7x)
    )(x)

    if Bp != B:
        g0, g1 = g0[:B], g1[:B]
    # PyTorch layout: [*bs, n, 2].  (A lane-dense (B, 2, N) output would avoid
    # this strided transpose if the consumer accepted it.)
    return jnp.stack([g0, g1], axis=-1)


def _topk_reference(scores, k, epsilon=0.01, max_iter=200):
    """Pure-JAX reference mirroring the PyTorch forward."""
    scores = scores.astype(jnp.float32)
    n = scores.shape[-1]
    anchors = jnp.array([0.0, 1.0], jnp.float32)
    C_raw = (scores[..., None] - anchors) ** 2                      # (B, n, 2)
    C = C_raw / jnp.max(C_raw, axis=(-2, -1), keepdims=True)
    mu = jnp.ones(scores.shape + (1,), jnp.float32) / n             # (B, n, 1)
    nu = jnp.array([k / n, (n - k) / n], jnp.float32).reshape(1, 1, 2)
    eps = jnp.float32(epsilon)
    f = jnp.zeros(scores.shape + (1,), jnp.float32)
    g = jnp.zeros(scores.shape[:-1] + (1, 2), jnp.float32)

    def body(_, carry):
        f, g = carry
        f = -eps * jax.nn.logsumexp(-(C - g) / eps, axis=-1,
                                    keepdims=True) + eps * jnp.log(mu)
        g = -eps * jax.nn.logsumexp(-(C - f) / eps, axis=-2,
                                    keepdims=True) + eps * jnp.log(nu)
        return f, g

    f, g = lax.fori_loop(0, max_iter, body, (f, g))
    return jnp.exp((-C + f + g) / eps)


if __name__ == "__main__":
    key0, key1 = jax.random.split(jax.random.PRNGKey(0))

    # (1) small shape matching the module's typical use
    B, N, K = 2, 8, 3
    scores = jax.random.uniform(key0, (B, N), dtype=jnp.float32)
    gamma = jax.block_until_ready(topk_custom(scores, k=K,
                                              epsilon=0.01, max_iter=200))
    ref = jax.block_until_ready(_topk_reference(scores, k=K,
                                                epsilon=0.01, max_iter=200))
    assert gamma.shape == (B, N, 2)
    assert bool(jnp.all(jnp.isfinite(gamma)))
    assert bool(jnp.allclose(gamma, ref, rtol=1e-3, atol=1e-4))

    # (2) exercise the tiled / padded-batch path (B > TB, grid > 1)
    B2, N2, K2 = 20, 128, 10
    scores2 = jax.random.uniform(key1, (B2, N2), dtype=jnp.float32)
    gamma2 = jax.block_until_ready(topk_custom(scores2, k=K2, epsilon=0.01,
                                               max_iter=200, block_b=8))
    ref2 = jax.block_until_ready(_topk_reference(scores2, k=K2,
                                                 epsilon=0.01, max_iter=200))
    assert gamma2.shape == (B2, N2, 2)
    assert bool(jnp.all(jnp.isfinite(gamma2)))
    assert bool(jnp.allclose(gamma2, ref2, rtol=1e-3, atol=1e-4))

    # TODO(synk): custom backward (TopKFunc.backward) not implemented; forward only.
    print("KERNEL_OK")
</pallas_src>

<mosaic_0001>
module attributes {stable_mosaic.version = 11 : i64} {
  func.func @_topk_sinkhorn_kernel(%arg0: i32, %arg1: memref<2x8xf32, #tpu.memory_space<vmem>>, %arg2: memref<2x8xf32, #tpu.memory_space<vmem>>, %arg3: memref<2x8xf32, #tpu.memory_space<vmem>>) attributes {dimension_semantics = [#tpu.dimension_semantics<parallel>], iteration_bounds = array<i64: 1>, scalar_prefetch = 0 : i64, scratch_operands = 0 : i64, tpu.core_type = #tpu.core_type<tc>, window_params = [{transform_indices = @transform_0, window_bounds = array<i64: 2, 8>}, {transform_indices = @transform_1, window_bounds = array<i64: 2, 8>}, {transform_indices = @transform_2, window_bounds = array<i64: 2, 8>}]} {
    %c0 = arith.constant 0 : index
    %c0_0 = arith.constant 0 : index
    %0 = vector.load %arg1[%c0, %c0_0] : memref<2x8xf32, #tpu.memory_space<vmem>>, vector<2x8xf32>
    %1 = arith.mulf %0, %0 : vector<2x8xf32>
    %cst = arith.constant 1.000000e+00 : f32
    %2 = vector.broadcast %cst : f32 to vector<2x8xf32>
    %3 = arith.subf %0, %2 : vector<2x8xf32>
    %4 = arith.mulf %3, %3 : vector<2x8xf32>
    %cst_1 = arith.constant dense<0xFF800000> : vector<2xf32>
    %5 = vector.multi_reduction <maximumf>, %1, %cst_1 [1] : vector<2x8xf32> to vector<2xf32>
    %6 = vector.shape_cast %5 : vector<2xf32> to vector<2x1xf32>
    %cst_2 = arith.constant dense<0xFF800000> : vector<2xf32>
    %7 = vector.multi_reduction <maximumf>, %4, %cst_2 [1] : vector<2x8xf32> to vector<2xf32>
    %8 = vector.shape_cast %7 : vector<2xf32> to vector<2x1xf32>
    %9 = arith.maximumf %6, %8 : vector<2x1xf32>
    %cst_3 = arith.constant 0.00999999977 : f32
    %10 = vector.broadcast %cst_3 : f32 to vector<2x1xf32>
    %11 = arith.mulf %9, %10 : vector<2x1xf32>
    %cst_4 = arith.constant -1.000000e+00 : f32
    %12 = vector.broadcast %cst_4 : f32 to vector<2x1xf32>
    %13 = arith.divf %12, %11 : vector<2x1xf32>
    %14 = vector.broadcast %13 : vector<2x1xf32> to vector<2x8xf32>
    %15 = arith.mulf %1, %14 : vector<2x8xf32>
    %16 = vector.broadcast %13 : vector<2x1xf32> to vector<2x8xf32>
    %17 = arith.mulf %4, %16 : vector<2x8xf32>
    %cst_5 = arith.constant 0.000000e+00 : f32
    %18 = vector.broadcast %cst_5 : f32 to vector<2x1xf32>
    %cst_6 = arith.constant 0.000000e+00 : f32
    %19 = vector.broadcast %cst_6 : f32 to vector<2x1xf32>
    %cst_7 = arith.constant -2.07944155 : f32
    %cst_8 = arith.constant -0.980829238 : f32
    %cst_9 = arith.constant -0.470003635 : f32
    %c0_i32 = arith.constant 0 : i32
    %c99_i32 = arith.constant 99 : i32
    %20 = arith.addi %c0_i32, %c99_i32 : i32
    %c1_i32 = arith.constant 1 : i32
    %21:2 = scf.for %arg4 = %c0_i32 to %20 step %c1_i32 iter_args(%arg5 = %18, %arg6 = %19) -> (vector<2x1xf32>, vector<2x1xf32>)  : i32 {
      %124 = vector.broadcast %arg5 : vector<2x1xf32> to vector<2x8xf32>
      %125 = arith.addf %15, %124 : vector<2x8xf32>
      %126 = vector.broadcast %arg6 : vector<2x1xf32> to vector<2x8xf32>
      %127 = arith.addf %17, %126 : vector<2x8xf32>
      %128 = arith.maximumf %125, %127 : vector<2x8xf32>
      %129 = arith.subf %125, %127 : vector<2x8xf32>
      %130 = math.absf %129 : vector<2x8xf32>
      %cst_38 = arith.constant 0.000000e+00 : f32
      %131 = vector.broadcast %cst_38 : f32 to vector<2x8xf32>
      %132 = arith.subf %131, %130 : vector<2x8xf32>
      %133 = math.exp %132 : vector<2x8xf32>
      %cst_39 = arith.constant 1.000000e+00 : f32
      %134 = vector.broadcast %cst_39 : f32 to vector<2x8xf32>
      %135 = arith.addf %134, %133 : vector<2x8xf32>
      %136 = math.log %135 : vector<2x8xf32>
      %137 = arith.addf %128, %136 : vector<2x8xf32>
      %cst_40 = arith.constant 0.000000e+00 : f32
      %138 = vector.broadcast %cst_40 : f32 to vector<2x8xf32>
      %139 = arith.subf %138, %137 : vector<2x8xf32>
      %140 = vector.broadcast %cst_7 : f32 to vector<2x8xf32>
      %141 = arith.addf %139, %140 : vector<2x8xf32>
      %142 = arith.addf %15, %141 : vector<2x8xf32>
      %143 = arith.addf %17, %141 : vector<2x8xf32>
      %cst_41 = arith.constant dense<0xFF800000> : vector<2xf32>
      %144 = vector.multi_reduction <maximumf>, %142, %cst_41 [1] : vector<2x8xf32> to vector<2xf32>
      %145 = vector.shape_cast %144 : vector<2xf32> to vector<2x1xf32>
      %cst_42 = arith.constant dense<0xFF800000> : vector<2xf32>
      %146 = vector.multi_reduction <maximumf>, %143, %cst_42 [1] : vector<2x8xf32> to vector<2xf32>
      %147 = vector.shape_cast %146 : vector<2xf32> to vector<2x1xf32>
      %148 = vector.broadcast %145 : vector<2x1xf32> to vector<2x8xf32>
      %149 = arith.subf %142, %148 : vector<2x8xf32>
      %150 = math.exp %149 : vector<2x8xf32>
      %cst_43 = arith.constant dense<0.000000e+00> : vector<2xf32>
      %151 = vector.multi_reduction <add>, %150, %cst_43 [1] : vector<2x8xf32> to vector<2xf32>
      %152 = vector.shape_cast %151 : vector<2xf32> to vector<2x1xf32>
      %153 = math.log %152 : vector<2x1xf32>
      %154 = arith.addf %145, %153 : vector<2x1xf32>
      %cst_44 = arith.constant 0.000000e+00 : f32
      %155 = vector.broadcast %cst_44 : f32 to vector<2x1xf32>
      %156 = arith.subf %155, %154 : vector<2x1xf32>
      %157 = vector.broadcast %cst_8 : f32 to vector<2x1xf32>
      %158 = arith.addf %156, %157 : vector<2x1xf32>
      %159 = vector.broadcast %147 : vector<2x1xf32> to vector<2x8xf32>
      %160 = arith.subf %143, %159 : vector<2x8xf32>
      %161 = math.exp %160 : vector<2x8xf32>
      %cst_45 = arith.constant dense<0.000000e+00> : vector<2xf32>
      %162 = vector.multi_reduction <add>, %161, %cst_45 [1] : vector<2x8xf32> to vector<2xf32>
      %163 = vector.shape_cast %162 : vector<2xf32> to vector<2x1xf32>
      %164 = math.log %163 : vector<2x1xf32>
      %165 = arith.addf %147, %164 : vector<2x1xf32>
      %cst_46 = arith.constant 0.000000e+00 : f32
      %166 = vector.broadcast %cst_46 : f32 to vector<2x1xf32>
      %167 = arith.subf %166, %165 : vector<2x1xf32>
      %168 = vector.broadcast %cst_9 : f32 to vector<2x1xf32>
      %169 = arith.addf %167, %168 : vector<2x1xf32>
      %170 = vector.broadcast %158 : vector<2x1xf32> to vector<2x8xf32>
      %171 = arith.addf %15, %170 : vector<2x8xf32>
      %172 = vector.broadcast %169 : vector<2x1xf32> to vector<2x8xf32>
      %173 = arith.addf %17, %172 : vector<2x8xf32>
      %174 = arith.maximumf %171, %173 : vector<2x8xf32>
      %175 = arith.subf %171, %173 : vector<2x8xf32>
      %176 = math.absf %175 : vector<2x8xf32>
      %cst_47 = arith.constant 0.000000e+00 : f32
      %177 = vector.broadcast %cst_47 : f32 to vector<2x8xf32>
      %178 = arith.subf %177, %176 : vector<2x8xf32>
      %179 = math.exp %178 : vector<2x8xf32>
      %cst_48 = arith.constant 1.000000e+00 : f32
      %180 = vector.broadcast %cst_48 : f32 to vector<2x8xf32>
      %181 = arith.addf %180, %179 : vector<2x8xf32>
      %182 = math.log %181 : vector<2x8xf32>
      %183 = arith.addf %174, %182 : vector<2x8xf32>
      %cst_49 = arith.constant 0.000000e+00 : f32
      %184 = vector.broadcast %cst_49 : f32 to vector<2x8xf32>
      %185 = arith.subf %184, %183 : vector<2x8xf32>
      %186 = vector.broadcast %cst_7 : f32 to vector<2x8xf32>
      %187 = arith.addf %185, %186 : vector<2x8xf32>
      %188 = arith.addf %15, %187 : vector<2x8xf32>
      %189 = arith.addf %17, %187 : vector<2x8xf32>
      %cst_50 = arith.constant dense<0xFF800000> : vector<2xf32>
      %190 = vector.multi_reduction <maximumf>, %188, %cst_50 [1] : vector<2x8xf32> to vector<2xf32>
      %191 = vector.shape_cast %190 : vector<2xf32> to vector<2x1xf32>
      %cst_51 = arith.constant dense<0xFF800000> : vector<2xf32>
      %192 = vector.multi_reduction <maximumf>, %189, %cst_51 [1] : vector<2x8xf32> to vector<2xf32>
      %193 = vector.shape_cast %192 : vector<2xf32> to vector<2x1xf32>
      %194 = vector.broadcast %191 : vector<2x1xf32> to vector<2x8xf32>
      %195 = arith.subf %188, %194 : vector<2x8xf32>
      %196 = math.exp %195 : vector<2x8xf32>
      %cst_52 = arith.constant dense<0.000000e+00> : vector<2xf32>
      %197 = vector.multi_reduction <add>, %196, %cst_52 [1] : vector<2x8xf32> to vector<2xf32>
      %198 = vector.shape_cast %197 : vector<2xf32> to vector<2x1xf32>
      %199 = math.log %198 : vector<2x1xf32>
      %200 = arith.addf %191, %199 : vector<2x1xf32>
      %cst_53 = arith.constant 0.000000e+00 : f32
      %201 = vector.broadcast %cst_53 : f32 to vector<2x1xf32>
      %202 = arith.subf %201, %200 : vector<2x1xf32>
      %203 = vector.broadcast %cst_8 : f32 to vector<2x1xf32>
      %204 = arith.addf %202, %203 : vector<2x1xf32>
      %205 = vector.broadcast %193 : vector<2x1xf32> to vector<2x8xf32>
      %206 = arith.subf %189, %205 : vector<2x8xf32>
      %207 = math.exp %206 : vector<2x8xf32>
      %cst_54 = arith.constant dense<0.000000e+00> : vector<2xf32>
      %208 = vector.multi_reduction <add>, %207, %cst_54 [1] : vector<2x8xf32> to vector<2xf32>
      %209 = vector.shape_cast %208 : vector<2xf32> to vector<2x1xf32>
      %210 = math.log %209 : vector<2x1xf32>
      %211 = arith.addf %193, %210 : vector<2x1xf32>
      %cst_55 = arith.constant 0.000000e+00 : f32
      %212 = vector.broadcast %cst_55 : f32 to vector<2x1xf32>
      %213 = arith.subf %212, %211 : vector<2x1xf32>
      %214 = vector.broadcast %cst_9 : f32 to vector<2x1xf32>
      %215 = arith.addf %213, %214 : vector<2x1xf32>
      scf.yield %204, %215 : vector<2x1xf32>, vector<2x1xf32>
    }
    %22 = vector.broadcast %21#0 : vector<2x1xf32> to vector<2x8xf32>
    %23 = arith.addf %15, %22 : vector<2x8xf32>
    %24 = vector.broadcast %21#1 : vector<2x1xf32> to vector<2x8xf32>
    %25 = arith.addf %17, %24 : vector<2x8xf32>
    %26 = arith.maximumf %23, %25 : vector<2x8xf32>
    %27 = arith.subf %23, %25 : vector<2x8xf32>
    %28 = math.absf %27 : vector<2x8xf32>
    %cst_10 = arith.constant 0.000000e+00 : f32
    %29 = vector.broadcast %cst_10 : f32 to vector<2x8xf32>
    %30 = arith.subf %29, %28 : vector<2x8xf32>
    %31 = math.exp %30 : vector<2x8xf32>
    %cst_11 = arith.constant 1.000000e+00 : f32
    %32 = vector.broadcast %cst_11 : f32 to vector<2x8xf32>
    %33 = arith.addf %32, %31 : vector<2x8xf32>
    %34 = math.log %33 : vector<2x8xf32>
    %35 = arith.addf %26, %34 : vector<2x8xf32>
    %cst_12 = arith.constant 0.000000e+00 : f32
    %36 = vector.broadcast %cst_12 : f32 to vector<2x8xf32>
    %37 = arith.subf %36, %35 : vector<2x8xf32>
    %cst_13 = arith.constant -2.07944155 : f32
    %38 = vector.broadcast %cst_13 : f32 to vector<2x8xf32>
    %39 = arith.addf %37, %38 : vector<2x8xf32>
    %40 = arith.addf %15, %39 : vector<2x8xf32>
    %41 = arith.addf %17, %39 : vector<2x8xf32>
    %cst_14 = arith.constant dense<0xFF800000> : vector<2xf32>
    %42 = vector.multi_reduction <maximumf>, %40, %cst_14 [1] : vector<2x8xf32> to vector<2xf32>
    %43 = vector.shape_cast %42 : vector<2xf32> to vector<2x1xf32>
    %cst_15 = arith.constant dense<0xFF800000> : vector<2xf32>
    %44 = vector.multi_reduction <maximumf>, %41, %cst_15 [1] : vector<2x8xf32> to vector<2xf32>
    %45 = vector.shape_cast %44 : vector<2xf32> to vector<2x1xf32>
    %46 = vector.broadcast %43 : vector<2x1xf32> to vector<2x8xf32>
    %47 = arith.subf %40, %46 : vector<2x8xf32>
    %48 = math.exp %47 : vector<2x8xf32>
    %cst_16 = arith.constant dense<0.000000e+00> : vector<2xf32>
    %49 = vector.multi_reduction <add>, %48, %cst_16 [1] : vector<2x8xf32> to vector<2xf32>
    %50 = vector.shape_cast %49 : vector<2xf32> to vector<2x1xf32>
    %51 = math.log %50 : vector<2x1xf32>
    %52 = arith.addf %43, %51 : vector<2x1xf32>
    %cst_17 = arith.constant 0.000000e+00 : f32
    %53 = vector.broadcast %cst_17 : f32 to vector<2x1xf32>
    %54 = arith.subf %53, %52 : vector<2x1xf32>
    %cst_18 = arith.constant -0.980829238 : f32
    %55 = vector.broadcast %cst_18 : f32 to vector<2x1xf32>
    %56 = arith.addf %54, %55 : vector<2x1xf32>
    %57 = vector.broadcast %45 : vector<2x1xf32> to vector<2x8xf32>
    %58 = arith.subf %41, %57 : vector<2x8xf32>
    %59 = math.exp %58 : vector<2x8xf32>
    %cst_19 = arith.constant dense<0.000000e+00> : vector<2xf32>
    %60 = vector.multi_reduction <add>, %59, %cst_19 [1] : vector<2x8xf32> to vector<2xf32>
    %61 = vector.shape_cast %60 : vector<2xf32> to vector<2x1xf32>
    %62 = math.log %61 : vector<2x1xf32>
    %63 = arith.addf %45, %62 : vector<2x1xf32>
    %cst_20 = arith.constant 0.000000e+00 : f32
    %64 = vector.broadcast %cst_20 : f32 to vector<2x1xf32>
    %65 = arith.subf %64, %63 : vector<2x1xf32>
    %cst_21 = arith.constant -0.470003635 : f32
    %66 = vector.broadcast %cst_21 : f32 to vector<2x1xf32>
    %67 = arith.addf %65, %66 : vector<2x1xf32>
    %68 = vector.broadcast %56 : vector<2x1xf32> to vector<2x8xf32>
    %69 = arith.addf %15, %68 : vector<2x8xf32>
    %70 = vector.broadcast %67 : vector<2x1xf32> to vector<2x8xf32>
    %71 = arith.addf %17, %70 : vector<2x8xf32>
    %72 = arith.maximumf %69, %71 : vector<2x8xf32>
    %73 = arith.subf %69, %71 : vector<2x8xf32>
    %74 = math.absf %73 : vector<2x8xf32>
    %cst_22 = arith.constant 0.000000e+00 : f32
    %75 = vector.broadcast %cst_22 : f32 to vector<2x8xf32>
    %76 = arith.subf %75, %74 : vector<2x8xf32>
    %77 = math.exp %76 : vector<2x8xf32>
    %cst_23 = arith.constant 1.000000e+00 : f32
    %78 = vector.broadcast %cst_23 : f32 to vector<2x8xf32>
    %79 = arith.addf %78, %77 : vector<2x8xf32>
    %80 = math.log %79 : vector<2x8xf32>
    %81 = arith.addf %72, %80 : vector<2x8xf32>
    %cst_24 = arith.constant 0.000000e+00 : f32
    %82 = vector.broadcast %cst_24 : f32 to vector<2x8xf32>
    %83 = arith.subf %82, %81 : vector<2x8xf32>
    %cst_25 = arith.constant -2.07944155 : f32
    %84 = vector.broadcast %cst_25 : f32 to vector<2x8xf32>
    %85 = arith.addf %83, %84 : vector<2x8xf32>
    %86 = arith.addf %15, %85 : vector<2x8xf32>
    %87 = arith.addf %17, %85 : vector<2x8xf32>
    %cst_26 = arith.constant dense<0xFF800000> : vector<2xf32>
    %88 = vector.multi_reduction <maximumf>, %86, %cst_26 [1] : vector<2x8xf32> to vector<2xf32>
    %89 = vector.shape_cast %88 : vector<2xf32> to vector<2x1xf32>
    %cst_27 = arith.constant dense<0xFF800000> : vector<2xf32>
    %90 = vector.multi_reduction <maximumf>, %87, %cst_27 [1] : vector<2x8xf32> to vector<2xf32>
    %91 = vector.shape_cast %90 : vector<2xf32> to vector<2x1xf32>
    %92 = vector.broadcast %89 : vector<2x1xf32> to vector<2x8xf32>
    %93 = arith.subf %86, %92 : vector<2x8xf32>
    %94 = math.exp %93 : vector<2x8xf32>
    %cst_28 = arith.constant dense<0.000000e+00> : vector<2xf32>
    %95 = vector.multi_reduction <add>, %94, %cst_28 [1] : vector<2x8xf32> to vector<2xf32>
    %96 = vector.shape_cast %95 : vector<2xf32> to vector<2x1xf32>
    %97 = math.log %96 : vector<2x1xf32>
    %98 = arith.addf %89, %97 : vector<2x1xf32>
    %cst_29 = arith.constant 0.000000e+00 : f32
    %99 = vector.broadcast %cst_29 : f32 to vector<2x1xf32>
    %100 = arith.subf %99, %98 : vector<2x1xf32>
    %cst_30 = arith.constant -0.980829238 : f32
    %101 = vector.broadcast %cst_30 : f32 to vector<2x1xf32>
    %102 = arith.addf %100, %101 : vector<2x1xf32>
    %103 = vector.broadcast %91 : vector<2x1xf32> to vector<2x8xf32>
    %104 = arith.subf %87, %103 : vector<2x8xf32>
    %105 = math.exp %104 : vector<2x8xf32>
    %cst_31 = arith.constant dense<0.000000e+00> : vector<2xf32>
    %106 = vector.multi_reduction <add>, %105, %cst_31 [1] : vector<2x8xf32> to vector<2xf32>
    %107 = vector.shape_cast %106 : vector<2xf32> to vector<2x1xf32>
    %108 = math.log %107 : vector<2x1xf32>
    %109 = arith.addf %91, %108 : vector<2x1xf32>
    %cst_32 = arith.constant 0.000000e+00 : f32
    %110 = vector.broadcast %cst_32 : f32 to vector<2x1xf32>
    %111 = arith.subf %110, %109 : vector<2x1xf32>
    %cst_33 = arith.constant -0.470003635 : f32
    %112 = vector.broadcast %cst_33 : f32 to vector<2x1xf32>
    %113 = arith.addf %111, %112 : vector<2x1xf32>
    %114 = arith.addf %15, %85 : vector<2x8xf32>
    %115 = vector.broadcast %102 : vector<2x1xf32> to vector<2x8xf32>
    %116 = arith.addf %114, %115 : vector<2x8xf32>
    %117 = math.exp %116 : vector<2x8xf32>
    %c0_34 = arith.constant 0 : index
    %c0_35 = arith.constant 0 : index
    %118 = vector.load %arg2[%c0_34, %c0_35] : memref<2x8xf32, #tpu.memory_space<vmem>>, vector<2x8xf32>
    tpu.vector_store %arg2[%c0_34, %c0_35], %117 {strides = array<i32>} : memref<2x8xf32, #tpu.memory_space<vmem>>, vector<2x8xf32>,
    %119 = arith.addf %17, %85 : vector<2x8xf32>
    %120 = vector.broadcast %113 : vector<2x1xf32> to vector<2x8xf32>
    %121 = arith.addf %119, %120 : vector<2x8xf32>
    %122 = math.exp %121 : vector<2x8xf32>
    %c0_36 = arith.constant 0 : index
    %c0_37 = arith.constant 0 : index
    %123 = vector.load %arg3[%c0_36, %c0_37] : memref<2x8xf32, #tpu.memory_space<vmem>>, vector<2x8xf32>
    tpu.vector_store %arg3[%c0_36, %c0_37], %122 {strides = array<i32>} : memref<2x8xf32, #tpu.memory_space<vmem>>, vector<2x8xf32>,
    return
  }
  func.func @transform_0(%arg0: i32) -> (i32, i32) {
    %c0_i32 = arith.constant 0 : i32
    %c0_i32_0 = arith.constant 0 : i32
    return %arg0, %c0_i32 : i32, i32
  }
  func.func @transform_1(%arg0: i32) -> (i32, i32) {
    %c0_i32 = arith.constant 0 : i32
    %c0_i32_0 = arith.constant 0 : i32
    return %arg0, %c0_i32 : i32, i32
  }
  func.func @transform_2(%arg0: i32) -> (i32, i32) {
    %c0_i32 = arith.constant 0 : i32
    %c0_i32_0 = arith.constant 0 : i32
    return %arg0, %c0_i32 : i32, i32
  }
}

</mosaic_0001>

<llo_original>
// kernel: tpu_custom_call.1
$region0: #{tpu_custom_call.1}
  #allocation0 [shape = 'u32[]', space=smem, size = 0x4, offset = 0x4, fixed_abs, tag = 'smem constant byte address 0x4 - core index']
  #allocation1 [shape = 'u32[144,128]{1,0:T(1,128)}', space=vmem, size = 0x12000, scoped, tag = 'internal scratch']
  %s0 = inlined_call_operand.hbm [shape: f32[2,8], index: 0, kind: input, shape index: {}]
  %s1 = inlined_call_operand.hbm [shape: f32[2,8], index: 1, kind: output, shape index: {0}]
  %s2 = inlined_call_operand.hbm [shape: f32[2,8], index: 2, kind: output, shape index: {1}]
  %3 = xla_tuple %s1, %s2
  %s4 = sld [smem:[#allocation0]]
  $region33: #{tpu_custom_call.1} parent=0
    _
  %s6 = ssub.s32 1, %s4
  %s7 = scalar_select 0, %s6, %s4
  $region1: #{tpu_custom_call.1} parent=0
    #allocation2 [shape = 'u8[1024]{0}', space=vmem, size = 0x400, scoped, tag = 'input window, operand 0, single buffered']
    #allocation3 [shape = 's32[1]{0}', space=sflag, size = 0x4, scoped, tag = 'scoped memory for tpu_custom_call.1']
    #allocation4 [shape = 's32[1]{0}', space=sflag, size = 0x4, scoped, tag = 'scoped memory for tpu_custom_call.1']
    #allocation5 [shape = 'u8[1024]{0}', space=vmem, size = 0x400, scoped, tag = 'output window, operand 0, single buffered']
    #allocation6 [shape = 'u8[1024]{0}', space=vmem, size = 0x400, scoped, tag = 'output window, operand 1, single buffered']
    #allocation7 [shape = 's32[1]{0}', space=sflag, size = 0x4, scoped, tag = 'scoped memory for tpu_custom_call.1']
    %8 = vsyncpa [#allocation3], 0
    %9 = vsyncpa [#allocation4], 0
    %10 = vsyncpa [#allocation7], 0
    // Predicated region
    $region2: #{tpu_custom_call.1} parent=1 // pred_check
      _
    $region3: #{tpu_custom_call.1} parent=1 // pred_check_branch
      %12 = sbr.rel (0) target = $region5
    $region4: #{tpu_custom_call.1} parent=1 // pred_region
      %s14 = ssub.s32 32, 32
      %15 = vsyncadd [#allocation3], %s14
      %s17 = sshll.u32 [#allocation2], 4
      %s18 = int_to_ptr.vmem [resolvable:$true] %s17
      %20 = dma.hbm_to_vmem [thread:$0]  %s0, 32, %s18, [#allocation3]
    $region5: #{tpu_custom_call.1} parent=1 // pred_fallthru
      _
    // Predicated region
    $region6: #{tpu_custom_call.1} parent=1 // pred_check
      _
    $region7: #{tpu_custom_call.1} parent=1 // pred_check_branch
      %22 = sbr.rel (0) target = $region9
    $region8: #{tpu_custom_call.1} parent=1 // pred_region
      %23 = dma.done [#allocation3], 32
    $region9: #{tpu_custom_call.1} parent=1 // pred_fallthru
      _
    %v24 = vld [vmem:[#allocation2] sm:$0x3]
    %v25 = vmul.f32 %v24, %v24
    %v26 = vsub.f32 %v24, 1.0
    %v27 = vmul.f32 %v26, %v26
    %vm28 = vcmask 58368
    %v29 = vsel %vm28, %v25, -inf
    %30 = vmax.xlane.f32.xlu0 %v29
    %v31 = vpop.xlane.xlu0 %30
    %v32 = vsel %vm28, %v27, -inf
    %33 = vmax.xlane.f32.xlu0 %v32
    %v34 = vpop.xlane.xlu0 %33
    %v35 = vmax.f32 %v31, %v34
    %v36 = vmul.f32 %v35, 0.01
    %v37 = vrcp.pop %v36
    %v38 = vmul.f32 -1.0, %v37
    %v39 = vmul.f32 %v25, %v38
    %v40 = vmul.f32 %v27, %v38
    loop: start=0, step=1, limit=99
    $region10: #{tpu_custom_call.1} parent=1 // loop_pre_header
      _
    $region11: #{tpu_custom_call.1} parent=1 // loop_header
      %s42 = sphi 0, %s46
      %p43 = scmp.ge.s32.totalorder %s42, 99
      %v47 = vphi 0.0, %v125
      %v48 = vphi 0.0, %v136
    $region12: #{tpu_custom_call.1} parent=1 // loop_header_branch
      %45 = sbr.rel (%p43) target = $region16
    $region13: #{tpu_custom_call.1} parent=1 // loop_body
      %v49 = vadd.f32 %v39, %v47
      %v50 = vadd.f32 %v40, %v48
      %v51 = vmax.f32 %v49, %v50
      %v52 = vsub.f32 %v49, %v50
      %v53 = vand.u32 2147483647, %v52
      %v54 = vsub.f32 0.0, %v53
      %v55 = vmul.f32 %v54, 1.442695
      %v56 = vpow.pop %v55
      %v57 = vadd.f32 %v56, 1.0
      %v58 = vlog2.pop %v57
      %v59 = vmul.f32 %v58, 0.6931472
      %v60 = vadd.f32 %v51, %v59
      %v61 = vsub.f32 0.0, %v60
      %v62 = vadd.f32 %v61, -2.0794415
      %v63 = vadd.f32 %v39, %v62
      %v64 = vadd.f32 %v40, %v62
      %v65 = vsel %vm28, %v63, -inf
      %66 = vmax.xlane.f32.xlu0 %v65
      %v67 = vpop.xlane.xlu0 %66
      %v68 = vsel %vm28, %v64, -inf
      %69 = vmax.xlane.f32.xlu0 %v68
      %v70 = vpop.xlane.xlu0 %69
      %v71 = vsub.f32 %v63, %v67
      %v72 = vmul.f32 %v71, 1.442695
      %v73 = vpow.pop %v72
      %v74 = vsel %vm28, %v73, 0.0
      %75 = vadd.xlane.f32.xlu0 %v74
      %v76 = vpop.xlane.xlu0 %75
      %v77 = vlog2.pop %v76
      %v78 = vmul.f32 %v77, 0.6931472
      %v79 = vadd.f32 %v67, %v78
      %v80 = vsub.f32 0.0, %v79
      %v81 = vadd.f32 %v80, -0.98082924
      %v82 = vsub.f32 %v64, %v70
      %v83 = vmul.f32 %v82, 1.442695
      %v84 = vpow.pop %v83
      %v85 = vsel %vm28, %v84, 0.0
      %86 = vadd.xlane.f32.xlu0 %v85
      %v87 = vpop.xlane.xlu0 %86
      %v88 = vlog2.pop %v87
      %v89 = vmul.f32 %v88, 0.6931472
      %v90 = vadd.f32 %v70, %v89
      %v91 = vsub.f32 0.0, %v90
      %v92 = vadd.f32 %v91, -0.47000363
      %v93 = vadd.f32 %v39, %v81
      %v94 = vadd.f32 %v40, %v92
      %v95 = vmax.f32 %v93, %v94
      %v96 = vsub.f32 %v93, %v94
      %v97 = vand.u32 2147483647, %v96
      %v98 = vsub.f32 0.0, %v97
      %v99 = vmul.f32 %v98, 1.442695
      %v100 = vpow.pop %v99
      %v101 = vadd.f32 %v100, 1.0
      %v102 = vlog2.pop %v101
      %v103 = vmul.f32 %v102, 0.6931472
      %v104 = vadd.f32 %v95, %v103
      %v105 = vsub.f32 0.0, %v104
      %v106 = vadd.f32 %v105, -2.0794415
      %v107 = vadd.f32 %v39, %v106
      %v108 = vadd.f32 %v40, %v106
      %v109 = vsel %vm28, %v107, -inf
      %110 = vmax.xlane.f32.xlu0 %v109
      %v111 = vpop.xlane.xlu0 %110
      %v112 = vsel %vm28, %v108, -inf
      %113 = vmax.xlane.f32.xlu0 %v112
      %v114 = vpop.xlane.xlu0 %113
      %v115 = vsub.f32 %v107, %v111
      %v116 = vmul.f32 %v115, 1.442695
      %v117 = vpow.pop %v116
      %v118 = vsel %vm28, %v117, 0.0
      %119 = vadd.xlane.f32.xlu0 %v118
      %v120 = vpop.xlane.xlu0 %119
      %v121 = vlog2.pop %v120
      %v122 = vmul.f32 %v121, 0.6931472
      %v123 = vadd.f32 %v111, %v122
      %v124 = vsub.f32 0.0, %v123
      %v125 = vadd.f32 %v124, -0.98082924
      %v126 = vsub.f32 %v108, %v114
      %v127 = vmul.f32 %v126, 1.442695
      %v128 = vpow.pop %v127
      %v129 = vsel %vm28, %v128, 0.0
      %130 = vadd.xlane.f32.xlu0 %v129
      %v131 = vpop.xlane.xlu0 %130
      %v132 = vlog2.pop %v131
      %v133 = vmul.f32 %v132, 0.6931472
      %v134 = vadd.f32 %v114, %v133
      %v135 = vsub.f32 0.0, %v134
      %v136 = vadd.f32 %v135, -0.47000363
    $region14: #{tpu_custom_call.1} parent=1 // loop_footer
      %s46 = sadd.s32 1, %s42
    $region15: #{tpu_custom_call.1} parent=1 // loop_footer_branch
      %41 = sbr.rel target = $region11
    $region16: #{tpu_custom_call.1} parent=1 // loop_exit
      _
    %v137 = vadd.f32 %v39, %v47
    %v138 = vadd.f32 %v40, %v48
    %v139 = vmax.f32 %v137, %v138
    %v140 = vsub.f32 %v137, %v138
    %v141 = vand.u32 2147483647, %v140
    %v142 = vsub.f32 0.0, %v141
    %v143 = vmul.f32 %v142, 1.442695
    %v144 = vpow.pop %v143
    %v145 = vadd.f32 %v144, 1.0
    %v146 = vlog2.pop %v145
    %v147 = vmul.f32 %v146, 0.6931472
    %v148 = vadd.f32 %v139, %v147
    %v149 = vsub.f32 0.0, %v148
    %v150 = vadd.f32 %v149, -2.0794415
    %v151 = vadd.f32 %v39, %v150
    %v152 = vadd.f32 %v40, %v150
    %v153 = vsel %vm28, %v151, -inf
    %154 = vmax.xlane.f32.xlu0 %v153
    %v155 = vpop.xlane.xlu0 %154
    %v156 = vsel %vm28, %v152, -inf
    %157 = vmax.xlane.f32.xlu0 %v156
    %v158 = vpop.xlane.xlu0 %157
    %v159 = vsub.f32 %v151, %v155
    %v160 = vmul.f32 %v159, 1.442695
    %v161 = vpow.pop %v160
    %v162 = vsel %vm28, %v161, 0.0
    %163 = vadd.xlane.f32.xlu0 %v162
    %v164 = vpop.xlane.xlu0 %163
    %v165 = vlog2.pop %v164
    %v166 = vmul.f32 %v165, 0.6931472
    %v167 = vadd.f32 %v155, %v166
    %v168 = vsub.f32 0.0, %v167
    %v169 = vadd.f32 %v168, -0.98082924
    %v170 = vsub.f32 %v152, %v158
    %v171 = vmul.f32 %v170, 1.442695
    %v172 = vpow.pop %v171
    %v173 = vsel %vm28, %v172, 0.0
    %174 = vadd.xlane.f32.xlu0 %v173
    %v175 = vpop.xlane.xlu0 %174
    %v176 = vlog2.pop %v175
    %v177 = vmul.f32 %v176, 0.6931472
    %v178 = vadd.f32 %v158, %v177
    %v179 = vsub.f32 0.0, %v178
    %v180 = vadd.f32 %v179, -0.47000363
    %v181 = vadd.f32 %v39, %v169
    %v182 = vadd.f32 %v40, %v180
    %v183 = vmax.f32 %v181, %v182
    %v184 = vsub.f32 %v181, %v182
    %v185 = vand.u32 2147483647, %v184
    %v186 = vsub.f32 0.0, %v185
    %v187 = vmul.f32 %v186, 1.442695
    %v188 = vpow.pop %v187
    %v189 = vadd.f32 %v188, 1.0
    %v190 = vlog2.pop %v189
    %v191 = vmul.f32 %v190, 0.6931472
    %v192 = vadd.f32 %v183, %v191
    %v193 = vsub.f32 0.0, %v192
    %v194 = vadd.f32 %v193, -2.0794415
    %v195 = vadd.f32 %v39, %v194
    %v196 = vadd.f32 %v40, %v194
    %v197 = vsel %vm28, %v195, -inf
    %198 = vmax.xlane.f32.xlu0 %v197
    %v199 = vpop.xlane.xlu0 %198
    %v200 = vsel %vm28, %v196, -inf
    %201 = vmax.xlane.f32.xlu0 %v200
    %v202 = vpop.xlane.xlu0 %201
    %v203 = vsub.f32 %v195, %v199
    %v204 = vmul.f32 %v203, 1.442695
    %v205 = vpow.pop %v204
    %v206 = vsel %vm28, %v205, 0.0
    %207 = vadd.xlane.f32.xlu0 %v206
    %v208 = vpop.xlane.xlu0 %207
    %v209 = vlog2.pop %v208
    %v210 = vmul.f32 %v209, 0.6931472
    %v211 = vadd.f32 %v199, %v210
    %v212 = vsub.f32 0.0, %v211
    %v213 = vadd.f32 %v212, -0.98082924
    %v214 = vsub.f32 %v196, %v202
    %v215 = vmul.f32 %v214, 1.442695
    %v216 = vpow.pop %v215
    %v217 = vsel %vm28, %v216, 0.0
    %218 = vadd.xlane.f32.xlu0 %v217
    %v219 = vpop.xlane.xlu0 %218
    %v220 = vlog2.pop %v219
    %v221 = vmul.f32 %v220, 0.6931472
    %v222 = vadd.f32 %v202, %v221
    %v223 = vsub.f32 0.0, %v222
    %v224 = vadd.f32 %v223, -0.47000363
    %v225 = vadd.f32 %v195, %v213
    %v226 = vmul.f32 %v225, 1.442695
    %v227 = vpow.pop %v226
    %228 = vst.msk [vmem:[#allocation5] sm:$0x3] %vm28, %v227
    %v229 = vadd.f32 %v196, %v224
    %v230 = vmul.f32 %v229, 1.442695
    %v231 = vpow.pop %v230
    %232 = vst.msk [vmem:[#allocation6] sm:$0x3] %vm28, %v231
    // Predicated region
    $region17: #{tpu_custom_call.1} parent=1 // pred_check
      _
    $region18: #{tpu_custom_call.1} parent=1 // pred_check_branch
      %234 = sbr.rel (0) target = $region20
    $region19: #{tpu_custom_call.1} parent=1 // pred_region
      %s236 = ssub.s32 32, 32
      %237 = vsyncadd [#allocation4], %s236
      %s239 = sshll.u32 [#allocation5], 4
      %s240 = int_to_ptr.vmem [resolvable:$true] %s239
      %242 = dma.vmem_to_hbm [thread:$0]  %s240, 32, %s1, [#allocation4]
    $region20: #{tpu_custom_call.1} parent=1 // pred_fallthru
      _
    // Predicated region
    $region21: #{tpu_custom_call.1} parent=1 // pred_check
      _
    $region22: #{tpu_custom_call.1} parent=1 // pred_check_branch
      %244 = sbr.rel (0) target = $region24
    $region23: #{tpu_custom_call.1} parent=1 // pred_region
      %s246 = ssub.s32 32, 32
      %247 = vsyncadd [#allocation7], %s246
      %s249 = sshll.u32 [#allocation6], 4
      %s250 = int_to_ptr.vmem [resolvable:$true] %s249
      %252 = dma.vmem_to_hbm [thread:$0]  %s250, 32, %s2, [#allocation7]
    $region24: #{tpu_custom_call.1} parent=1 // pred_fallthru
      _
    // Predicated region
    $region25: #{tpu_custom_call.1} parent=1 // pred_check
      _
    $region26: #{tpu_custom_call.1} parent=1 // pred_check_branch
      %254 = sbr.rel (0) target = $region28
    $region27: #{tpu_custom_call.1} parent=1 // pred_region
      %255 = dma.done [#allocation4], 32
    $region28: #{tpu_custom_call.1} parent=1 // pred_fallthru
      _
    // Predicated region
    $region29: #{tpu_custom_call.1} parent=1 // pred_check
      _
    $region30: #{tpu_custom_call.1} parent=1 // pred_check_branch
      %257 = sbr.rel (0) target = $region32
    $region31: #{tpu_custom_call.1} parent=1 // pred_region
      %258 = dma.done [#allocation7], 32
    $region32: #{tpu_custom_call.1} parent=1 // pred_fallthru
      _
    %259 = vsyncpa [#allocation3], 1
    %260 = vsyncpa [#allocation4], 1
    %261 = vsyncpa [#allocation7], 1

</llo_original>
